<compile_context>
chip_gen: v7x
topology: tpu7x:2x2x1
jax: 0.10.0
libtpu: 0.0.40
codegen_flags: <defaults>
</compile_context>

<pallas_src>
import math

import jax
import jax.numpy as jnp
from jax.experimental import pallas as pl
from jax.experimental.pallas import tpu as pltpu


# ---------------------------------------------------------------------------
# Pallas kernel: identity pass-through (the only concrete semantics of BaseVAE)
# ---------------------------------------------------------------------------
def _identity_kernel(x_ref, o_ref):
    # Whole-tile load/store — a pure streaming copy (mem-bound).
    o_ref[...] = x_ref[...]


# Tunables (generation-aware, see header comment).
_LANE_CAP = 1024                      # widest lane-dense last dim we reshape to
_TARGET_BLOCK_BYTES = 2 * 1024 * 1024  # ~2 MiB/tile; x4 (double-buffered in+out) = 8 MiB
_WHOLE_ARRAY_VMEM_BYTES = 4 * 1024 * 1024  # whole-array fallback limit


def _choose_layout(total: int, itemsize: int):
    """Pick a lane-dense (rows, lanes) factorization and a block row count.

    Returns (rows, lanes, block_rows) with:
      * lanes a multiple of 128 (<= _LANE_CAP) dividing `total`,
      * block_rows either == rows (full extent) or a multiple of 8 dividing rows,
      * block bytes ~<= _TARGET_BLOCK_BYTES.
    Returns None if no clean factorization exists.
    """
    if total % 128 != 0:
        return None
    lanes = 0
    for cand in range(_LANE_CAP, 0, -128):
        if total % cand == 0:
            lanes = cand
            break
    if lanes == 0:
        return None
    rows = total // lanes
    max_rows = max(1, _TARGET_BLOCK_BYTES // (lanes * itemsize))
    if rows <= max_rows:
        # Fits in a single block. If splitting in two is free (still large
        # blocks), do it so the grid shards across v7x's two TensorCores.
        half = rows // 2
        if rows % 16 == 0 and half * lanes * itemsize >= 512 * 1024:
            return rows, lanes, half
        return rows, lanes, rows
    # Largest multiple-of-8 divisor of rows not exceeding max_rows.
    start = (max_rows // 8) * 8
    for br in range(start, 0, -8):
        if rows % br == 0:
            return rows, lanes, br
    return None


def _identity_pallas_2d(x2d: jax.Array, block_rows: int) -> jax.Array:
    """Tiled lane-dense streaming copy. x2d: (rows, lanes), rows % block_rows == 0."""
    rows, lanes = x2d.shape
    grid_len = rows // block_rows
    return pl.pallas_call(
        _identity_kernel,
        out_shape=jax.ShapeDtypeStruct((rows, lanes), x2d.dtype),
        grid=(grid_len,),
        in_specs=[pl.BlockSpec((block_rows, lanes), lambda i: (i, 0))],
        out_specs=pl.BlockSpec((block_rows, lanes), lambda i: (i, 0)),
        input_output_aliases={0: 0},
        compiler_params=pltpu.CompilerParams(
            dimension_semantics=("parallel",),
        ),
    )(x2d)


def _identity_pallas_whole(x2d: jax.Array) -> jax.Array:
    """Single whole-array VMEM block (no grid) — for small/odd-sized tensors."""
    return pl.pallas_call(
        _identity_kernel,
        out_shape=jax.ShapeDtypeStruct(x2d.shape, x2d.dtype),
        in_specs=[pl.BlockSpec(memory_space=pltpu.MemorySpace.VMEM)],
        out_specs=pl.BlockSpec(memory_space=pltpu.MemorySpace.VMEM),
        input_output_aliases={0: 0},
    )(x2d)


def _identity_forward_impl(x: jax.Array) -> jax.Array:
    shape = x.shape
    total = math.prod(shape) if shape else 1
    if total == 0:
        return x
    itemsize = x.dtype.itemsize

    layout = _choose_layout(total, itemsize)
    if layout is not None:
        rows, lanes, block_rows = layout
        x2d = jnp.reshape(x, (rows, lanes))
        y2d = _identity_pallas_2d(x2d, block_rows)
        return jnp.reshape(y2d, shape)

    if total * itemsize <= _WHOLE_ARRAY_VMEM_BYTES:
        x2d = jnp.reshape(x, (1, total))
        y2d = _identity_pallas_whole(x2d)
        return jnp.reshape(y2d, shape)

    # TODO(synk): rare fallback for large tensors whose element count is not a
    # multiple of 128 — pads once (one extra HBM pass) to a lane-dense slab.
    pad = (-total) % (8 * _LANE_CAP)
    flat = jnp.pad(jnp.reshape(x, (total,)), (0, pad))
    padded = total + pad
    rows, lanes, block_rows = _choose_layout(padded, itemsize)
    y2d = _identity_pallas_2d(jnp.reshape(flat, (rows, lanes)), block_rows)
    return jnp.reshape(jnp.reshape(y2d, (padded,))[:total], shape)


# jit so the reshape plumbing fuses and the in/out aliasing is resolved by XLA.
_identity_forward = jax.jit(_identity_forward_impl)


# ---------------------------------------------------------------------------
# BaseVAE equivalent
# ---------------------------------------------------------------------------
class BaseVAE:
    """JAX/Pallas mirror of the abstract PyTorch BaseVAE."""

    def __init__(self) -> None:
        # The PyTorch __init__ defines no parameters; nothing to initialize.
        pass

    def encode(self, x):
        # TODO(synk): abstract in the reference module (raises NotImplementedError).
        raise NotImplementedError

    def decode(self, x):
        # TODO(synk): abstract in the reference module (raises NotImplementedError).
        raise NotImplementedError

    def sample(self, batch_size: int, current_device: int, **kwargs):
        # TODO(synk): abstract in the reference module (raises NotImplementedError).
        raise NotImplementedError

    def generate(self, x, **kwargs):
        # TODO(synk): abstract in the reference module (raises NotImplementedError).
        raise NotImplementedError

    def loss_fuction(self, *inputs, **kwargs):  # typo carried from the reference
        # TODO(synk): abstract in the reference module (@abstractmethod, no body).
        raise NotImplementedError

    def forward(self, x: jax.Array, **kwargs) -> jax.Array:
        # forward is @abstractmethod in the reference; the base contract is a
        # tensor-in / tensor-out pass.  Implemented as an exact identity whose
        # data path runs through a Pallas TPU kernel.
        return _identity_forward(x)

    __call__ = forward


if __name__ == "__main__":
    key = jax.random.PRNGKey(0)
    # Small NCHW input consistent with a VAE image input: batch=2, C=4, 16x16.
    x = jax.random.normal(key, (2, 4, 16, 16), dtype=jnp.float32)

    model = BaseVAE()
    y = jax.block_until_ready(model(x))

    # Sanity: base-class forward is identity; verify exact reproduction.
    assert y.shape == x.shape and y.dtype == x.dtype
    assert bool(jnp.all(y == x))

    # Also exercise the multi-block tiled path (grid > 1, lane-dense tiles).
    x2 = jax.random.normal(jax.random.PRNGKey(0), (4, 16, 128, 128),
                           dtype=jnp.float32)
    y2 = jax.block_until_ready(model(x2))
    assert y2.shape == x2.shape and y2.dtype == x2.dtype
    assert bool(jnp.all(y2 == x2))

    print("KERNEL_OK")
</pallas_src>

<mosaic_0001>
module attributes {stable_mosaic.version = 11 : i64} {
  func.func @_identity_kernel(%arg0: i32, %arg1: memref<2x1024xf32, #tpu.memory_space<vmem>>, %arg2: memref<2x1024xf32, #tpu.memory_space<vmem>>) attributes {dimension_semantics = [#tpu.dimension_semantics<parallel>], iteration_bounds = array<i64: 1>, scalar_prefetch = 0 : i64, scratch_operands = 0 : i64, tpu.core_type = #tpu.core_type<tc>, window_params = [{transform_indices = @transform_0, window_bounds = array<i64: 2, 1024>}, {transform_indices = @transform_1, window_bounds = array<i64: 2, 1024>}]} {
    %c0 = arith.constant 0 : index
    %c0_0 = arith.constant 0 : index
    %0 = vector.load %arg1[%c0, %c0_0] : memref<2x1024xf32, #tpu.memory_space<vmem>>, vector<2x1024xf32>
    %c0_1 = arith.constant 0 : index
    %c0_2 = arith.constant 0 : index
    %1 = vector.load %arg2[%c0_1, %c0_2] : memref<2x1024xf32, #tpu.memory_space<vmem>>, vector<2x1024xf32>
    tpu.vector_store %arg2[%c0_1, %c0_2], %0 {strides = array<i32>} : memref<2x1024xf32, #tpu.memory_space<vmem>>, vector<2x1024xf32>,
    return
  }
  func.func @transform_0(%arg0: i32) -> (i32, i32) {
    %c0_i32 = arith.constant 0 : i32
    %c0_i32_0 = arith.constant 0 : i32
    return %arg0, %c0_i32 : i32, i32
  }
  func.func @transform_1(%arg0: i32) -> (i32, i32) {
    %c0_i32 = arith.constant 0 : i32
    %c0_i32_0 = arith.constant 0 : i32
    return %arg0, %c0_i32 : i32, i32
  }
}

</mosaic_0001>

<llo_original>
// kernel: _identity_forward_impl.1
$region0: #{_identity_forward_impl.1}
  #allocation0 [shape = 'u32[]', space=smem, size = 0x4, offset = 0x4, fixed_abs, tag = 'smem constant byte address 0x4 - core index']
  #allocation1 [shape = 'u32[144,128]{1,0:T(1,128)}', space=vmem, size = 0x12000, scoped, tag = 'internal scratch']
  %s0 = inlined_call_operand.vmem [shape: f32[2,1024], index: 0, kind: input, shape index: {}, may-alias: {0,1}]
  %s1 = inlined_call_operand.vmem [shape: f32[2,1024], index: 1, kind: output, shape index: {}, may-alias: {0,1}]
  %s2 = sld [smem:[#allocation0]]
  $region14: #{_identity_forward_impl.1} parent=0
    _
  %s4 = ssub.s32 1, %s2
  %s5 = scalar_select 0, %s4, %s2
  // Predicated region
  $region2: #{_identity_forward_impl.1} parent=0 // pred_check
    _
  $region3: #{_identity_forward_impl.1} parent=0 // pred_check_branch
    %7 = sbr.rel (0) target = $region5
  $region4: #{_identity_forward_impl.1} parent=0 // pred_region
    _
  $region5: #{_identity_forward_impl.1} parent=0 // pred_fallthru
    _
  %v8 = vld [vmem:[%s0] sm:$0xff]
  %v9 = vld [vmem:[%s0 + $0x8] sm:$0xff]
  %10 = vst [vmem:[%s1] sm:$0xff] %v8
  %11 = vst [vmem:[%s1 + $0x8] sm:$0xff] %v9
  // Predicated region
  $region6: #{_identity_forward_impl.1} parent=0 // pred_check
    _
  $region7: #{_identity_forward_impl.1} parent=0 // pred_check_branch
    %13 = sbr.rel (0) target = $region9
  $region8: #{_identity_forward_impl.1} parent=0 // pred_region
    _
  $region9: #{_identity_forward_impl.1} parent=0 // pred_fallthru
    _
  // Predicated region
  $region10: #{_identity_forward_impl.1} parent=0 // pred_check
    _
  $region11: #{_identity_forward_impl.1} parent=0 // pred_check_branch
    %15 = sbr.rel (0) target = $region13
  $region12: #{_identity_forward_impl.1} parent=0 // pred_region
    _
  $region13: #{_identity_forward_impl.1} parent=0 // pred_fallthru
    _

</llo_original>
